<compile_context>
chip_gen: v7x
topology: tpu7x:2x2x1
jax: 0.10.0
libtpu: 0.0.40
codegen_flags: <defaults>
</compile_context>

<pallas_src>
import jax
import jax.numpy as jnp
from jax.experimental import pallas as pl
from jax.experimental.pallas import tpu as pltpu


def _align8(n: int) -> int:
    return ((n + 7) // 8) * 8


def pack_valuenet_params(params, input_dim, hidden_dim):
    """Pack (w1,b1,w2,b2,w3,b3) into one zero-padded (rows, hidden) f32 buffer.

    Row offsets are rounded up to multiples of 8 so every in-kernel slice is
    sublane-aligned. Zero padding keeps unused rows inert.
    Layout (row offsets):
      w1 : [o_w1, o_w1+input_dim)   -- (input_dim, hidden)
      b1 : [o_b1]                   -- (hidden,)
      w2 : [o_w2, o_w2+hidden)      -- (hidden, hidden)
      b2 : [o_b2]                   -- (hidden,)
      w3 : [o_w3]                   -- (hidden,) row == W3^T
      b3 : [o_b3, lane 0]           -- scalar
    """
    w1, b1, w2, b2, w3, b3 = params
    o_w1 = 0
    o_b1 = _align8(o_w1 + input_dim)
    o_w2 = _align8(o_b1 + 1)
    o_b2 = _align8(o_w2 + hidden_dim)
    o_w3 = _align8(o_b2 + 1)
    o_b3 = _align8(o_w3 + 1)
    rows = _align8(o_b3 + 1)

    packed = jnp.zeros((rows, hidden_dim), jnp.float32)
    packed = packed.at[o_w1:o_w1 + input_dim, :].set(w1)
    packed = packed.at[o_b1, :].set(b1)
    packed = packed.at[o_w2:o_w2 + hidden_dim, :].set(w2)
    packed = packed.at[o_b2, :].set(b2)
    packed = packed.at[o_w3, :].set(w3.reshape(hidden_dim))
    packed = packed.at[o_b3, 0].set(b3.reshape(()))

    offsets = dict(w1=o_w1, b1=o_b1, w2=o_w2, b2=o_b2, w3=o_w3, b3=o_b3)
    return packed, offsets


def make_valuenet_kernel(input_dim, hidden_dim, off):
    o_w1, o_b1 = off["w1"], off["b1"]
    o_w2, o_b2 = off["w2"], off["b2"]
    o_w3, o_b3 = off["w3"], off["b3"]

    def kernel(x_ref, p_ref, o_ref):
        x = x_ref[...]                                             # (B, in)

        # fc1 + ReLU  (MXU matmul, f32 accumulate; bias row from packed buf)
        w1 = p_ref[o_w1:o_w1 + input_dim, :]                       # (in, H)
        b1 = p_ref[o_b1:o_b1 + 1, :]                               # (1, H)
        h1 = jnp.maximum(
            jnp.dot(x, w1, preferred_element_type=jnp.float32) + b1, 0.0)

        # fc2 + ReLU
        w2 = p_ref[o_w2:o_w2 + hidden_dim, :]                      # (H, H)
        b2 = p_ref[o_b2:o_b2 + 1, :]                               # (1, H)
        h2 = jnp.maximum(
            jnp.dot(h1, w2, preferred_element_type=jnp.float32) + b2, 0.0)

        # fc3 (output dim 1): VPU multiply + lane reduction instead of an
        # N=1 MXU matmul (avoids vmatmul push/pop latency in the epilogue).
        w3 = p_ref[o_w3:o_w3 + 1, :]                               # (1, H)
        b3 = p_ref[o_b3:o_b3 + 1, 0:1]                             # (1, 1)
        out = jnp.sum(h2 * w3, axis=-1, keepdims=True) + b3        # (B, 1)

        o_ref[...] = out.astype(o_ref.dtype)

    return kernel


def valuenet_forward(x, packed_params, input_dim, hidden_dim, offsets):
    batch = x.shape[0]
    kernel = make_valuenet_kernel(input_dim, hidden_dim, offsets)
    vmem = pl.BlockSpec(memory_space=pltpu.MemorySpace.VMEM)
    cost = pl.CostEstimate(
        flops=2 * batch * (input_dim * hidden_dim
                           + hidden_dim * hidden_dim
                           + hidden_dim),
        transcendentals=0,
        bytes_accessed=int(x.size * 4 + packed_params.size * 4 + batch * 4),
    )
    # Whole problem fits in a couple of vregs: full-array blocks, no grid.
    # TODO(synk): if this runs once per RL timestep, add a grid over T with a
    # constant index_map for the packed params so the weights are DMA'd once
    # and stay VMEM-resident across steps.
    return pl.pallas_call(
        kernel,
        out_shape=jax.ShapeDtypeStruct((batch, 1), jnp.float32),
        in_specs=[vmem, vmem],
        out_specs=vmem,
        cost_estimate=cost,
    )(x, packed_params)


def init_valuenet_params(key, input_dim, hidden_dim):
    """Deterministic init mimicking torch.nn.Linear default (+/- 1/sqrt(fan_in)).

    Weights are stored (in_features, out_features), i.e. W_pt.T, so the kernel
    computes x @ W + b == x @ W_pt.T + b_pt.
    """
    ks = jax.random.split(key, 6)

    def uniform(k, shape, fan_in):
        bound = 1.0 / jnp.sqrt(jnp.float32(fan_in))
        return jax.random.uniform(k, shape, jnp.float32, -bound, bound)

    w1 = uniform(ks[0], (input_dim, hidden_dim), input_dim)
    b1 = uniform(ks[1], (hidden_dim,), input_dim)
    w2 = uniform(ks[2], (hidden_dim, hidden_dim), hidden_dim)
    b2 = uniform(ks[3], (hidden_dim,), hidden_dim)
    w3 = uniform(ks[4], (hidden_dim, 1), hidden_dim)
    b3 = uniform(ks[5], (1,), hidden_dim)
    return (w1, b1, w2, b2, w3, b3)


def valuenet_reference(x, params):
    """Pure-JAX reference of the PyTorch forward."""
    w1, b1, w2, b2, w3, b3 = params
    h1 = jnp.maximum(x @ w1 + b1, 0.0)
    h2 = jnp.maximum(h1 @ w2 + b2, 0.0)
    return h2 @ w3 + b3


if __name__ == "__main__":
    # CartPole: state dim = 4; small hidden size; small batch.
    input_dim, hidden_dim, batch = 4, 32, 8

    key = jax.random.PRNGKey(0)
    k_params, k_x = jax.random.split(key)
    params = init_valuenet_params(k_params, input_dim, hidden_dim)
    x = jax.random.normal(k_x, (batch, input_dim), jnp.float32)

    packed, offsets = pack_valuenet_params(params, input_dim, hidden_dim)

    out = valuenet_forward(x, packed, input_dim, hidden_dim, offsets)
    out = jax.block_until_ready(out)

    ref = valuenet_reference(x, params)
    assert out.shape == (batch, 1)
    assert jnp.allclose(out, ref, atol=1e-5, rtol=1e-5), (out, ref)

    print("KERNEL_OK")
</pallas_src>

<mosaic_0001>
module attributes {stable_mosaic.version = 11 : i64} {
  func.func @kernel(%arg0: memref<8x4xf32, #tpu.memory_space<vmem>>, %arg1: memref<72x32xf32, #tpu.memory_space<vmem>>, %arg2: memref<8x1xf32, #tpu.memory_space<vmem>>) attributes {dimension_semantics = [], scalar_prefetch = 0 : i64, scratch_operands = 0 : i64, tpu.core_type = #tpu.core_type<tc>} {
    %c0 = arith.constant 0 : index
    %c0_0 = arith.constant 0 : index
    %0 = vector.load %arg0[%c0, %c0_0] : memref<8x4xf32, #tpu.memory_space<vmem>>, vector<8x4xf32>
    %c0_1 = arith.constant 0 : index
    %c0_2 = arith.constant 0 : index
    %1 = vector.load %arg1[%c0_1, %c0_2] : memref<72x32xf32, #tpu.memory_space<vmem>>, vector<4x32xf32>
    %c8 = arith.constant 8 : index
    %c0_3 = arith.constant 0 : index
    %2 = vector.load %arg1[%c8, %c0_3] : memref<72x32xf32, #tpu.memory_space<vmem>>, vector<1x32xf32>
    %cst = arith.constant dense<0.000000e+00> : vector<8x32xf32>
    %3 = tpu.matmul %0, %1, %cst {dimension_numbers = #tpu.dot_dimension_numbers<[1], [0], [0], [1], [0, 0, 1, 1], [], []>} : vector<8x4xf32>, vector<4x32xf32>, vector<8x32xf32> -> vector<8x32xf32>
    %4 = vector.broadcast %2 : vector<1x32xf32> to vector<8x32xf32>
    %5 = arith.addf %3, %4 : vector<8x32xf32>
    %cst_4 = arith.constant 0.000000e+00 : f32
    %6 = vector.broadcast %cst_4 : f32 to vector<8x32xf32>
    %7 = arith.maximumf %5, %6 : vector<8x32xf32>
    %c16 = arith.constant 16 : index
    %c0_5 = arith.constant 0 : index
    %8 = vector.load %arg1[%c16, %c0_5] : memref<72x32xf32, #tpu.memory_space<vmem>>, vector<32x32xf32>
    %c48 = arith.constant 48 : index
    %c0_6 = arith.constant 0 : index
    %9 = vector.load %arg1[%c48, %c0_6] : memref<72x32xf32, #tpu.memory_space<vmem>>, vector<1x32xf32>
    %cst_7 = arith.constant dense<0.000000e+00> : vector<8x32xf32>
    %10 = tpu.matmul %7, %8, %cst_7 {dimension_numbers = #tpu.dot_dimension_numbers<[1], [0], [0], [1], [0, 0, 1, 1], [], []>} : vector<8x32xf32>, vector<32x32xf32>, vector<8x32xf32> -> vector<8x32xf32>
    %11 = vector.broadcast %9 : vector<1x32xf32> to vector<8x32xf32>
    %12 = arith.addf %10, %11 : vector<8x32xf32>
    %cst_8 = arith.constant 0.000000e+00 : f32
    %13 = vector.broadcast %cst_8 : f32 to vector<8x32xf32>
    %14 = arith.maximumf %12, %13 : vector<8x32xf32>
    %c56 = arith.constant 56 : index
    %c0_9 = arith.constant 0 : index
    %15 = vector.load %arg1[%c56, %c0_9] : memref<72x32xf32, #tpu.memory_space<vmem>>, vector<1x32xf32>
    %c64 = arith.constant 64 : index
    %c0_10 = arith.constant 0 : index
    %16 = vector.load %arg1[%c64, %c0_10] : memref<72x32xf32, #tpu.memory_space<vmem>>, vector<1x1xf32>
    %17 = vector.broadcast %15 : vector<1x32xf32> to vector<8x32xf32>
    %18 = arith.mulf %14, %17 : vector<8x32xf32>
    %cst_11 = arith.constant dense<0.000000e+00> : vector<8xf32>
    %19 = vector.multi_reduction <add>, %18, %cst_11 [1] : vector<8x32xf32> to vector<8xf32>
    %20 = vector.shape_cast %19 : vector<8xf32> to vector<8x1xf32>
    %21 = vector.broadcast %16 : vector<1x1xf32> to vector<8x1xf32>
    %22 = arith.addf %20, %21 : vector<8x1xf32>
    %c0_12 = arith.constant 0 : index
    %c0_13 = arith.constant 0 : index
    %23 = vector.load %arg2[%c0_12, %c0_13] : memref<8x1xf32, #tpu.memory_space<vmem>>, vector<8x1xf32>
    tpu.vector_store %arg2[%c0_12, %c0_13], %22 {strides = array<i32>} : memref<8x1xf32, #tpu.memory_space<vmem>>, vector<8x1xf32>,
    return
  }
}

</mosaic_0001>

<llo_original>
// kernel: tpu_custom_call.1
$region0: #{tpu_custom_call.1}
  #allocation0 [shape = 'u32[]', space=smem, size = 0x4, offset = 0x4, fixed_abs, tag = 'smem constant byte address 0x4 - core index']
  #allocation1 [shape = 'u32[144,128]{1,0:T(1,128)}', space=vmem, size = 0x12000, scoped, tag = 'internal scratch']
  %s0 = inlined_call_operand.vmem [shape: f32[8,4], index: 0, kind: input, shape index: {}]
  %s1 = inlined_call_operand.vmem [shape: f32[72,32], index: 1, kind: input, shape index: {}]
  %s2 = inlined_call_operand.vmem [shape: f32[8,1], index: 2, kind: output, shape index: {}]
  %s3 = sld [smem:[#allocation0]]
  $region18: #{tpu_custom_call.1} parent=0
    _
  %s5 = ssub.s32 1, %s3
  %s6 = scalar_select 0, %s5, %s3
  // Predicated region
  $region2: #{tpu_custom_call.1} parent=0 // pred_check
    _
  $region3: #{tpu_custom_call.1} parent=0 // pred_check_branch
    %8 = sbr.rel (0) target = $region5
  $region4: #{tpu_custom_call.1} parent=0 // pred_region
    _
  $region5: #{tpu_custom_call.1} parent=0 // pred_fallthru
    _
  // Predicated region
  $region6: #{tpu_custom_call.1} parent=0 // pred_check
    _
  $region7: #{tpu_custom_call.1} parent=0 // pred_check_branch
    %10 = sbr.rel (0) target = $region9
  $region8: #{tpu_custom_call.1} parent=0 // pred_region
    _
  $region9: #{tpu_custom_call.1} parent=0 // pred_fallthru
    _
  %v11 = vld [vmem:[%s0] sm:$0xff]
  %v12 = vld [vmem:[%s1] sm:$0xf]
  %v13 = vld [vmem:[%s1 + $0x8] sm:$0x1]
  %v14 = vlaneseq
  %v15 = vshrl.u32 %v14, 7
  %v16 = vsub.s32 0, %v15
  %v17 = vrot.slane %v13, %v16
  %vm18 = vcmask 31744
  %v20 = vsel %vm18, %v11, 0
  %vm22 = vcmask 1043456
  %v24 = vsel %vm22, %v12, 0
  %26 = vmatprep.subr.mxu0 0.0
  %27 = vmatpush1.msra.mxu0 %v24
  %28 = vmatprep.subr.mxu0 0.0
  %29 = vmatpush1.msra.mxu0 0.0
  %30 = vmatprep.subr.mxu0 0.0
  %31 = vmatpush1.msra.mxu0 0.0
  %32 = vmatprep.subr.mxu0 0.0
  %33 = vmatpush1.msra.mxu0 0.0
  %34 = vmatprep.subr.mxu0 0.0
  %35 = vmatpush1.msra.mxu0 0.0
  %36 = vmatprep.subr.mxu0 0.0
  %37 = vmatpush1.msra.mxu0 0.0
  %38 = vmatprep.subr.mxu0 0.0
  %39 = vmatpush1.msra.mxu0 0.0
  %40 = vmatprep.subr.mxu0 0.0
  %41 = vmatpush1.msra.mxu0 0.0
  %42 = vmatprep.subr.mxu0 0.0
  %43 = vmatpush1.msra.mxu0 0.0
  %44 = vmatprep.subr.mxu0 0.0
  %45 = vmatpush1.msra.mxu0 0.0
  %46 = vmatprep.subr.mxu0 0.0
  %47 = vmatpush1.msra.mxu0 0.0
  %48 = vmatprep.subr.mxu0 0.0
  %49 = vmatpush1.msra.mxu0 0.0
  %50 = vmatprep.subr.mxu0 0.0
  %51 = vmatpush1.msra.mxu0 0.0
  %52 = vmatprep.subr.mxu0 0.0
  %53 = vmatpush1.msra.mxu0 0.0
  %54 = vmatprep.subr.mxu0 0.0
  %55 = vmatpush1.msra.mxu0 0.0
  %56 = vmatprep.subr.mxu0 0.0
  %57 = vmatpush1.msra.mxu0 0.0
  %58 = vmatprep.subr.mxu0 0.0
  %59 = vmatpush1.msra.mxu0 0.0
  %60 = vmatprep.subr.mxu0 0.0
  %61 = vmatpush1.msra.mxu0 0.0
  %62 = vmatprep.subr.mxu0 0.0
  %63 = vmatpush1.msra.mxu0 0.0
  %64 = vmatprep.subr.mxu0 0.0
  %65 = vmatpush1.msra.mxu0 0.0
  %66 = vmatprep.subr.mxu0 0.0
  %67 = vmatpush1.msra.mxu0 0.0
  %68 = vmatprep.subr.mxu0 0.0
  %69 = vmatpush1.msra.mxu0 0.0
  %70 = vmatprep.subr.mxu0 0.0
  %71 = vmatpush1.msra.mxu0 0.0
  %72 = vmatprep.subr.mxu0 0.0
  %73 = vmatpush1.msra.mxu0 0.0
  %74 = vmatprep.subr.mxu0 0.0
  %75 = vmatpush1.msra.mxu0 0.0
  %76 = vmatprep.subr.mxu0 0.0
  %77 = vmatpush1.msra.mxu0 0.0
  %78 = vmatprep.subr.mxu0 0.0
  %79 = vmatpush1.msra.mxu0 0.0
  %80 = vmatprep.subr.mxu0 0.0
  %81 = vmatpush1.msra.mxu0 0.0
  %82 = vmatprep.subr.mxu0 0.0
  %83 = vmatpush1.msra.mxu0 0.0
  %84 = vmatprep.subr.mxu0 0.0
  %85 = vmatpush1.msra.mxu0 0.0
  %86 = vmatprep.subr.mxu0 0.0
  %87 = vmatpush1.msra.mxu0 0.0
  %88 = vmatprep.subr.mxu0 0.0
  %89 = vmatpush1.msra.mxu0 0.0
  %90 = vmatprep.mubr.f32.mxu0 0.0
  %91 = vmatmul.mubr.f32.gmra.mrb[0].mxu0 %v20
  %v92 = vpop.f32.mrb[0].mxu0
  %v93 = vadd.f32 %v17, %v92
  %v94 = vpop.f32.mrb[0].mxu0
  %95 = vdwg.mxu0
  %v96 = vmax.f32 %v93, 0.0
  %v97 = vld [vmem:[%s1 + $0x10] sm:$0xff]
  %v98 = vld [vmem:[%s1 + $0x18] sm:$0xff]
  %v99 = vld [vmem:[%s1 + $0x20] sm:$0xff]
  %v100 = vld [vmem:[%s1 + $0x28] sm:$0xff]
  %v101 = vld [vmem:[%s1 + $0x30] sm:$0x1]
  %v102 = vlaneseq
  %v103 = vshrl.u32 %v102, 7
  %v104 = vsub.s32 0, %v103
  %v105 = vrot.slane %v101, %v104
  %vm106 = vcmask 261120
  %v108 = vsel %vm106, %v96, 0
  %110 = vmatprep.subr.mxu0 0.0
  %111 = vmatpush1.msra.mxu0 %v97
  %112 = vmatprep.subr.mxu0 0.0
  %113 = vmatpush1.msra.mxu0 %v98
  %114 = vmatprep.subr.mxu0 0.0
  %115 = vmatpush1.msra.mxu0 %v99
  %116 = vmatprep.subr.mxu0 0.0
  %117 = vmatpush1.msra.mxu0 %v100
  %118 = vmatprep.subr.mxu0 0.0
  %119 = vmatpush1.msra.mxu0 0.0
  %120 = vmatprep.subr.mxu0 0.0
  %121 = vmatpush1.msra.mxu0 0.0
  %122 = vmatprep.subr.mxu0 0.0
  %123 = vmatpush1.msra.mxu0 0.0
  %124 = vmatprep.subr.mxu0 0.0
  %125 = vmatpush1.msra.mxu0 0.0
  %126 = vmatprep.subr.mxu0 0.0
  %127 = vmatpush1.msra.mxu0 0.0
  %128 = vmatprep.subr.mxu0 0.0
  %129 = vmatpush1.msra.mxu0 0.0
  %130 = vmatprep.subr.mxu0 0.0
  %131 = vmatpush1.msra.mxu0 0.0
  %132 = vmatprep.subr.mxu0 0.0
  %133 = vmatpush1.msra.mxu0 0.0
  %134 = vmatprep.subr.mxu0 0.0
  %135 = vmatpush1.msra.mxu0 0.0
  %136 = vmatprep.subr.mxu0 0.0
  %137 = vmatpush1.msra.mxu0 0.0
  %138 = vmatprep.subr.mxu0 0.0
  %139 = vmatpush1.msra.mxu0 0.0
  %140 = vmatprep.subr.mxu0 0.0
  %141 = vmatpush1.msra.mxu0 0.0
  %142 = vmatprep.subr.mxu0 0.0
  %143 = vmatpush1.msra.mxu0 0.0
  %144 = vmatprep.subr.mxu0 0.0
  %145 = vmatpush1.msra.mxu0 0.0
  %146 = vmatprep.subr.mxu0 0.0
  %147 = vmatpush1.msra.mxu0 0.0
  %148 = vmatprep.subr.mxu0 0.0
  %149 = vmatpush1.msra.mxu0 0.0
  %150 = vmatprep.subr.mxu0 0.0
  %151 = vmatpush1.msra.mxu0 0.0
  %152 = vmatprep.subr.mxu0 0.0
  %153 = vmatpush1.msra.mxu0 0.0
  %154 = vmatprep.subr.mxu0 0.0
  %155 = vmatpush1.msra.mxu0 0.0
  %156 = vmatprep.subr.mxu0 0.0
  %157 = vmatpush1.msra.mxu0 0.0
  %158 = vmatprep.subr.mxu0 0.0
  %159 = vmatpush1.msra.mxu0 0.0
  %160 = vmatprep.subr.mxu0 0.0
  %161 = vmatpush1.msra.mxu0 0.0
  %162 = vmatprep.subr.mxu0 0.0
  %163 = vmatpush1.msra.mxu0 0.0
  %164 = vmatprep.subr.mxu0 0.0
  %165 = vmatpush1.msra.mxu0 0.0
  %166 = vmatprep.subr.mxu0 0.0
  %167 = vmatpush1.msra.mxu0 0.0
  %168 = vmatprep.subr.mxu0 0.0
  %169 = vmatpush1.msra.mxu0 0.0
  %170 = vmatprep.subr.mxu0 0.0
  %171 = vmatpush1.msra.mxu0 0.0
  %172 = vmatprep.subr.mxu0 0.0
  %173 = vmatpush1.msra.mxu0 0.0
  %174 = vmatprep.mubr.f32.mxu0 0.0
  %175 = vmatmul.mubr.f32.gmra.mrb[0].mxu0 %v108
  %v176 = vpop.f32.mrb[0].mxu0
  %v177 = vadd.f32 %v105, %v176
  %v178 = vpop.f32.mrb[0].mxu0
  %179 = vdwg.mxu0
  %v180 = vmax.f32 %v177, 0.0
  %v181 = vld [vmem:[%s1 + $0x38] sm:$0x1]
  %v182 = vld [vmem:[%s1 + $0x40] sm:$0x1]
  %v183 = vlaneseq
  %v184 = vshrl.u32 %v183, 7
  %v185 = vsub.s32 0, %v184
  %v186 = vrot.slane %v181, %v185
  %v187 = vmul.f32 %v180, %v186
  %v188 = vsel %vm106, %v187, 0.0
  %189 = vadd.xlane.f32.xlu0 %v188
  %v190 = vpop.xlane.xlu0 %189
  %v191 = vlaneseq
  %v192 = vshrl.u32 %v191, 7
  %v193 = vsub.s32 0, %v192
  %v194 = vrot.slane %v182, %v193
  %v195 = vadd.f32 %v190, %v194
  %vm196 = vcmask 7168
  %197 = vst.msk [vmem:[%s2] sm:$0xff] %vm196, %v195
  // Predicated region
  $region10: #{tpu_custom_call.1} parent=0 // pred_check
    _
  $region11: #{tpu_custom_call.1} parent=0 // pred_check_branch
    %199 = sbr.rel (0) target = $region13
  $region12: #{tpu_custom_call.1} parent=0 // pred_region
    _
  $region13: #{tpu_custom_call.1} parent=0 // pred_fallthru
    _
  // Predicated region
  $region14: #{tpu_custom_call.1} parent=0 // pred_check
    _
  $region15: #{tpu_custom_call.1} parent=0 // pred_check_branch
    %201 = sbr.rel (0) target = $region17
  $region16: #{tpu_custom_call.1} parent=0 // pred_region
    _
  $region17: #{tpu_custom_call.1} parent=0 // pred_fallthru
    _

</llo_original>
